<compile_context>
chip_gen: v5e
topology: v5e:2x2
jax: 0.10.0
libtpu: 0.0.40
codegen_flags: <defaults>
</compile_context>

<pallas_src>
import jax
import jax.numpy as jnp
from jax import lax
from jax.experimental import pallas as pl
from jax.experimental.pallas import tpu as pltpu

FEAT = 20

# Packed-parameter layout (rows of a (PACK_ROWS, FEAT) f32 buffer).
WF_OFF = 0      # rows [0, 20)   : W^T @ rand_weight          (fused 1st matmul)
WT_OFF = 24     # rows [24, 44)  : W^T                        (shared linear)
BF_ROW = 48     # row  48        : b @ rand_weight + 1        (fused 1st bias)
B_ROW = 49      # row  49        : b
PACK_ROWS = 56  # padded to a multiple of 8 sublanes


def fixed_hidden_mlp_kernel(x_ref, p_ref, out_ref):
    x = x_ref[...]                                  # (B, 20)
    wf = p_ref[WF_OFF:WF_OFF + FEAT, :]             # (20, 20) = W^T @ R
    wt = p_ref[WT_OFF:WT_OFF + FEAT, :]             # (20, 20) = W^T
    bf = p_ref[BF_ROW:BF_ROW + 1, :]                # (1, 20)  = b @ R + 1
    b = p_ref[B_ROW:B_ROW + 1, :]                   # (1, 20)

    # X = relu(linear(X) @ rand_weight + 1)  -- fused into one MXU pass
    h = jnp.maximum(
        jnp.dot(x, wf, preferred_element_type=jnp.float32) + bf, 0.0)
    # X = self.linear(X)   (same shared layer)
    h = jnp.dot(h, wt, preferred_element_type=jnp.float32) + b

    # Reduce once; the halving loop only rescales by an exact power of two.
    abs_sum = jnp.sum(jnp.abs(h), keepdims=True)    # (1, 1)
    total = jnp.sum(h, keepdims=True)               # (1, 1)

    # Closed-form trip count of `while s > 1: s /= 2` (halving is exact fp32):
    #   s <= 1           -> n = 0
    #   s = 2^e exactly  -> n = e
    #   otherwise        -> n = e + 1   (e = unbiased exponent of s)
    bits = pltpu.bitcast(abs_sum, jnp.int32)        # sign bit is 0 (s >= 0)
    exp_b = (bits >> 23) & 0xFF                     # biased exponent
    mant = bits & 0x7FFFFF
    n = jnp.where(abs_sum > 1.0,
                  jnp.where(mant == 0, exp_b - 127, exp_b - 126),
                  0)                                # (1, 1) int32, 0..128
    # scale = 2^-n, split so each factor's exponent field stays normal.
    n1 = n >> 1
    n2 = n - n1
    s1 = pltpu.bitcast((127 - n1) << 23, jnp.float32)
    s2 = pltpu.bitcast((127 - n2) << 23, jnp.float32)

    # return X.sum()  (== sum(h) * 2^-n), emitted via 1-D SMEM scalar path.
    out_ref[0] = jnp.sum(total * s1 * s2)


def pack_params(w, b, rand_weight):
    """One-time init-side work: fuse + transpose + pack into one VMEM buffer.

    w: (20, 20) torch-style (out, in); b: (20,); rand_weight: (20, 20).
    """
    w = jnp.asarray(w, jnp.float32)
    b = jnp.asarray(b, jnp.float32)
    rw = jnp.asarray(rand_weight, jnp.float32)
    wt = w.T                                        # (in, out): kernel does x @ wt
    b2 = b.reshape(1, FEAT)
    w_fused = wt @ rw                               # relu((xW^T+b)R+1) == relu(x(W^T R)+(bR+1))
    b_fused = b2 @ rw + 1.0
    packed = jnp.zeros((PACK_ROWS, FEAT), jnp.float32)
    packed = packed.at[WF_OFF:WF_OFF + FEAT].set(w_fused)
    packed = packed.at[WT_OFF:WT_OFF + FEAT].set(wt)
    packed = packed.at[BF_ROW].set(b_fused[0])
    packed = packed.at[B_ROW].set(b2[0])
    return packed


@jax.jit
def fixed_hidden_mlp(x, packed_params):
    """x: (B, 20) f32; packed_params: (56, 20) f32 from pack_params()."""
    out = pl.pallas_call(
        fixed_hidden_mlp_kernel,
        out_shape=jax.ShapeDtypeStruct((1,), jnp.float32),
        in_specs=[
            pl.BlockSpec(memory_space=pltpu.MemorySpace.VMEM),  # x
            pl.BlockSpec(memory_space=pltpu.MemorySpace.VMEM),  # packed params
        ],
        out_specs=pl.BlockSpec(memory_space=pltpu.MemorySpace.SMEM),
    )(x, packed_params)
    return out[0]


def fixed_hidden_mlp_ref(x, w, b, rand_weight):
    """Pure-JAX reference mirroring the PyTorch module literally."""
    h = x @ w.T + b
    h = jnp.maximum(h @ rand_weight + 1.0, 0.0)
    h = h @ w.T + b
    h = lax.while_loop(lambda c: jnp.sum(jnp.abs(c)) > 1.0, lambda c: c / 2.0, h)
    return jnp.sum(h)


if __name__ == "__main__":
    key = jax.random.PRNGKey(0)
    k_rw, k_w, k_b, k_x = jax.random.split(key, 4)

    # Deterministic parameter init mirroring the PyTorch module's __init__:
    #   rand_weight = torch.rand((20, 20))  -> U[0, 1)
    #   nn.Linear(20, 20) default init      -> U[-1/sqrt(20), 1/sqrt(20)]
    rand_weight = jax.random.uniform(k_rw, (FEAT, FEAT), dtype=jnp.float32)
    bound = 1.0 / float(FEAT) ** 0.5
    w = jax.random.uniform(k_w, (FEAT, FEAT), dtype=jnp.float32,
                           minval=-bound, maxval=bound)
    b = jax.random.uniform(k_b, (FEAT,), dtype=jnp.float32,
                           minval=-bound, maxval=bound)

    batch = 8
    x = jax.random.normal(k_x, (batch, FEAT), dtype=jnp.float32)

    packed = jax.block_until_ready(pack_params(w, b, rand_weight))  # once, at init

    out = jax.block_until_ready(fixed_hidden_mlp(x, packed))
    ref = jax.block_until_ready(fixed_hidden_mlp_ref(x, w, b, rand_weight))

    assert out.shape == ()
    # Fused-weight matmul order differs from the literal reference only in
    # fp32 rounding; tolerance reflects that.
    assert jnp.allclose(out, ref, rtol=1e-4, atol=1e-5), (out, ref)
    print("KERNEL_OK")
</pallas_src>

<mosaic_0001>
module attributes {stable_mosaic.version = 11 : i64} {
  func.func @fixed_hidden_mlp_kernel(%arg0: memref<8x20xf32, #tpu.memory_space<vmem>>, %arg1: memref<56x20xf32, #tpu.memory_space<vmem>>, %arg2: memref<1xf32, #tpu.memory_space<smem>>) attributes {dimension_semantics = [], scalar_prefetch = 0 : i64, scratch_operands = 0 : i64, tpu.core_type = #tpu.core_type<tc>} {
    %c0 = arith.constant 0 : index
    %c0_0 = arith.constant 0 : index
    %0 = vector.load %arg0[%c0, %c0_0] : memref<8x20xf32, #tpu.memory_space<vmem>>, vector<8x20xf32>
    %c0_1 = arith.constant 0 : index
    %c0_2 = arith.constant 0 : index
    %1 = vector.load %arg1[%c0_1, %c0_2] : memref<56x20xf32, #tpu.memory_space<vmem>>, vector<20x20xf32>
    %c24 = arith.constant 24 : index
    %c0_3 = arith.constant 0 : index
    %2 = vector.load %arg1[%c24, %c0_3] : memref<56x20xf32, #tpu.memory_space<vmem>>, vector<20x20xf32>
    %c48 = arith.constant 48 : index
    %c0_4 = arith.constant 0 : index
    %3 = vector.load %arg1[%c48, %c0_4] : memref<56x20xf32, #tpu.memory_space<vmem>>, vector<1x20xf32>
    %c49 = arith.constant 49 : index
    %c0_5 = arith.constant 0 : index
    %4 = vector.load %arg1[%c49, %c0_5] : memref<56x20xf32, #tpu.memory_space<vmem>>, vector<1x20xf32>
    %cst = arith.constant dense<0.000000e+00> : vector<8x20xf32>
    %5 = tpu.matmul %0, %1, %cst {dimension_numbers = #tpu.dot_dimension_numbers<[1], [0], [0], [1], [0, 0, 1, 1], [], []>} : vector<8x20xf32>, vector<20x20xf32>, vector<8x20xf32> -> vector<8x20xf32>
    %6 = vector.broadcast %3 : vector<1x20xf32> to vector<8x20xf32>
    %7 = arith.addf %5, %6 : vector<8x20xf32>
    %cst_6 = arith.constant 0.000000e+00 : f32
    %8 = vector.broadcast %cst_6 : f32 to vector<8x20xf32>
    %9 = arith.maximumf %7, %8 : vector<8x20xf32>
    %cst_7 = arith.constant dense<0.000000e+00> : vector<8x20xf32>
    %10 = tpu.matmul %9, %2, %cst_7 {dimension_numbers = #tpu.dot_dimension_numbers<[1], [0], [0], [1], [0, 0, 1, 1], [], []>} : vector<8x20xf32>, vector<20x20xf32>, vector<8x20xf32> -> vector<8x20xf32>
    %11 = vector.broadcast %4 : vector<1x20xf32> to vector<8x20xf32>
    %12 = arith.addf %10, %11 : vector<8x20xf32>
    %13 = math.absf %12 : vector<8x20xf32>
    %14 = vector.shape_cast %13 : vector<8x20xf32> to vector<1x8x20xf32>
    %cst_8 = arith.constant dense<0.000000e+00> : vector<1xf32>
    %15 = vector.multi_reduction <add>, %14, %cst_8 [1, 2] : vector<1x8x20xf32> to vector<1xf32>
    %16 = vector.shape_cast %15 : vector<1xf32> to vector<1x1x1xf32>
    %17 = vector.extract %16[0, 0, 0] : f32 from vector<1x1x1xf32>
    %18 = vector.broadcast %17 : f32 to vector<1x1xf32>
    %19 = vector.shape_cast %12 : vector<8x20xf32> to vector<1x8x20xf32>
    %cst_9 = arith.constant dense<0.000000e+00> : vector<1xf32>
    %20 = vector.multi_reduction <add>, %19, %cst_9 [1, 2] : vector<1x8x20xf32> to vector<1xf32>
    %21 = vector.shape_cast %20 : vector<1xf32> to vector<1x1x1xf32>
    %22 = vector.extract %21[0, 0, 0] : f32 from vector<1x1x1xf32>
    %23 = vector.broadcast %22 : f32 to vector<1x1xf32>
    %24 = tpu.bitcast %18 : vector<1x1xf32> -> vector<1x1xi32>
    %c23_i32 = arith.constant 23 : i32
    %25 = vector.broadcast %c23_i32 : i32 to vector<1x1xi32>
    %26 = arith.shrsi %24, %25 : vector<1x1xi32>
    %c255_i32 = arith.constant 255 : i32
    %27 = vector.broadcast %c255_i32 : i32 to vector<1x1xi32>
    %28 = arith.andi %26, %27 : vector<1x1xi32>
    %c8388607_i32 = arith.constant 8388607 : i32
    %29 = vector.broadcast %c8388607_i32 : i32 to vector<1x1xi32>
    %30 = arith.andi %24, %29 : vector<1x1xi32>
    %cst_10 = arith.constant 1.000000e+00 : f32
    %31 = vector.broadcast %cst_10 : f32 to vector<1x1xf32>
    %32 = arith.cmpf ogt, %18, %31 : vector<1x1xf32>
    %c0_i32 = arith.constant 0 : i32
    %33 = vector.broadcast %c0_i32 : i32 to vector<1x1xi32>
    %34 = arith.cmpi eq, %30, %33 : vector<1x1xi32>
    %c127_i32 = arith.constant 127 : i32
    %35 = vector.broadcast %c127_i32 : i32 to vector<1x1xi32>
    %36 = arith.subi %28, %35 : vector<1x1xi32>
    %c126_i32 = arith.constant 126 : i32
    %37 = vector.broadcast %c126_i32 : i32 to vector<1x1xi32>
    %38 = arith.subi %28, %37 : vector<1x1xi32>
    %39 = arith.select %34, %36, %38 : vector<1x1xi1>, vector<1x1xi32>
    %c0_i32_11 = arith.constant 0 : i32
    %40 = vector.broadcast %c0_i32_11 : i32 to vector<1x1xi32>
    %41 = arith.select %32, %39, %40 : vector<1x1xi1>, vector<1x1xi32>
    %c1_i32 = arith.constant 1 : i32
    %42 = vector.broadcast %c1_i32 : i32 to vector<1x1xi32>
    %43 = arith.shrsi %41, %42 : vector<1x1xi32>
    %44 = arith.subi %41, %43 : vector<1x1xi32>
    %c127_i32_12 = arith.constant 127 : i32
    %45 = vector.broadcast %c127_i32_12 : i32 to vector<1x1xi32>
    %46 = arith.subi %45, %43 : vector<1x1xi32>
    %c23_i32_13 = arith.constant 23 : i32
    %47 = vector.broadcast %c23_i32_13 : i32 to vector<1x1xi32>
    %48 = arith.shli %46, %47 : vector<1x1xi32>
    %49 = tpu.bitcast %48 : vector<1x1xi32> -> vector<1x1xf32>
    %c127_i32_14 = arith.constant 127 : i32
    %50 = vector.broadcast %c127_i32_14 : i32 to vector<1x1xi32>
    %51 = arith.subi %50, %44 : vector<1x1xi32>
    %c23_i32_15 = arith.constant 23 : i32
    %52 = vector.broadcast %c23_i32_15 : i32 to vector<1x1xi32>
    %53 = arith.shli %51, %52 : vector<1x1xi32>
    %54 = tpu.bitcast %53 : vector<1x1xi32> -> vector<1x1xf32>
    %55 = arith.mulf %23, %49 : vector<1x1xf32>
    %56 = arith.mulf %55, %54 : vector<1x1xf32>
    %57 = vector.shape_cast %56 : vector<1x1xf32> to vector<1x1x1xf32>
    %cst_16 = arith.constant dense<0.000000e+00> : vector<1xf32>
    %58 = vector.multi_reduction <add>, %57, %cst_16 [1, 2] : vector<1x1x1xf32> to vector<1xf32>
    %59 = vector.shape_cast %58 : vector<1xf32> to vector<1x1x1xf32>
    %60 = vector.extract %59[0, 0, 0] : f32 from vector<1x1x1xf32>
    %c0_17 = arith.constant 0 : index
    %61 = memref.load %arg2[%c0_17] : memref<1xf32, #tpu.memory_space<smem>>
    memref.store %60, %arg2[%c0_17] : memref<1xf32, #tpu.memory_space<smem>>
    return
  }
}

</mosaic_0001>

<llo_original>
// kernel: fixed_hidden_mlp.1
$region0: #{fixed_hidden_mlp.1}
  #allocation0 [shape = 'u32[]', space=smem, size = 0x4, offset = 0x4, fixed_abs, tag = 'smem constant byte address 0x4 - core index']
  #allocation1 [shape = 'u32[72,128]{1,0:T(1,128)}', space=vmem, size = 0x9000, scoped, tag = 'internal scratch']
  %s0 = inlined_call_operand.vmem [shape: f32[8,20], index: 0, kind: input, shape index: {}]
  %s1 = inlined_call_operand.vmem [shape: f32[56,20], index: 1, kind: input, shape index: {}]
  %s2 = inlined_call_operand.hbm [shape: f32[1], index: 2, kind: output, shape index: {}]
  %s3 = sld [smem:[#allocation0]]
  $region18: #{fixed_hidden_mlp.1} parent=0
    _
  %s5 = ssub.s32 1, %s3
  %s6 = scalar_select 0, %s5, %s3
  $region1: #{fixed_hidden_mlp.1} parent=0
    #allocation2 [shape = 'u8[512]{0}', space=smem, size = 0x200, scoped, tag = 'output window, operand 0, single buffered']
    #allocation3 [shape = 's32[1]{0}', space=sflag, size = 0x4, scoped, tag = 'scoped memory for fixed_hidden_mlp.1']
    %7 = vsyncpa [#allocation3], 0
    // Predicated region
    $region2: #{fixed_hidden_mlp.1} parent=1 // pred_check
      _
    $region3: #{fixed_hidden_mlp.1} parent=1 // pred_check_branch
      %9 = sbr.rel (0) target = $region5
    $region4: #{fixed_hidden_mlp.1} parent=1 // pred_region
      _
    $region5: #{fixed_hidden_mlp.1} parent=1 // pred_fallthru
      _
    // Predicated region
    $region6: #{fixed_hidden_mlp.1} parent=1 // pred_check
      _
    $region7: #{fixed_hidden_mlp.1} parent=1 // pred_check_branch
      %11 = sbr.rel (0) target = $region9
    $region8: #{fixed_hidden_mlp.1} parent=1 // pred_region
      _
    $region9: #{fixed_hidden_mlp.1} parent=1 // pred_fallthru
      _
    %v12 = vld [vmem:[%s0] sm:$0xff]
    %v13 = vld [vmem:[%s1] sm:$0xff]
    %v14 = vld [vmem:[%s1 + $0x8] sm:$0xff]
    %v15 = vld [vmem:[%s1 + $0x10] sm:$0xf]
    %v16 = vld [vmem:[%s1 + $0x18] sm:$0xff]
    %v17 = vld [vmem:[%s1 + $0x20] sm:$0xff]
    %v18 = vld [vmem:[%s1 + $0x28] sm:$0xf]
    %v19 = vld [vmem:[%s1 + $0x30] sm:$0x1]
    %v20 = vld [vmem:[%s1 + $0x31] sm:$0x1]
    %v21 = vperm.slane %v19, 0
    %vm22 = vcmask 162816
    %v24 = vsel %vm22, %v12, 0
    %vm26 = vcmask 1043456
    %v28 = vsel %vm26, %v15, 0
    %30 = vmatpush.msra.mxu0 0.0
    %31 = vmatpush.msra.mxu0 0.0
    %32 = vmatpush.msra.mxu0 0.0
    %33 = vmatpush.msra.mxu0 0.0
    %34 = vmatpush.msra.mxu0 0.0
    %35 = vmatpush.msra.mxu0 0.0
    %36 = vmatpush.msra.mxu0 0.0
    %37 = vmatpush.msra.mxu0 0.0
    %38 = vmatpush.msra.mxu0 0.0
    %39 = vmatpush.msra.mxu0 0.0
    %40 = vmatpush.msra.mxu0 0.0
    %41 = vmatpush.msra.mxu0 0.0
    %42 = vmatpush.msra.mxu0 0.0
    %43 = vmatpush.msra.mxu0 %v28
    %44 = vmatpush.msra.mxu0 %v14
    %45 = vmatpush.msra.mxu0 %v13
    %46 = vmatmul.f32.gmra.mxu0 %v24
    %v47 = vpop.f32.mrf.mxu0
    %v48 = vadd.f32 %v21, %v47
    %49 = vdwg.mxu0
    %v50 = vmax.f32 %v48, 0.0
    %v51 = vperm.slane %v20, 0
    %v53 = vsel %vm22, %v50, 0
    %v56 = vsel %vm26, %v18, 0
    %58 = vmatpush.msra.mxu0 0.0
    %59 = vmatpush.msra.mxu0 0.0
    %60 = vmatpush.msra.mxu0 0.0
    %61 = vmatpush.msra.mxu0 0.0
    %62 = vmatpush.msra.mxu0 0.0
    %63 = vmatpush.msra.mxu0 0.0
    %64 = vmatpush.msra.mxu0 0.0
    %65 = vmatpush.msra.mxu0 0.0
    %66 = vmatpush.msra.mxu0 0.0
    %67 = vmatpush.msra.mxu0 0.0
    %68 = vmatpush.msra.mxu0 0.0
    %69 = vmatpush.msra.mxu0 0.0
    %70 = vmatpush.msra.mxu0 0.0
    %71 = vmatpush.msra.mxu0 %v56
    %72 = vmatpush.msra.mxu0 %v17
    %73 = vmatpush.msra.mxu0 %v16
    %74 = vmatmul.f32.gmra.mxu0 %v53
    %v75 = vpop.f32.mrf.mxu0
    %v76 = vadd.f32 %v51, %v75
    %77 = vdwg.mxu0
    %v78 = vand.u32 2147483647, %v76
    %v79 = vsel %vm22, %v78, 0.0
    %80 = vadd.xlane.f32.xlu0 %v79
    %v81 = vpop.xlane.xlu0 %80
    %v82 = vrot.slane %v81, 4
    %v83 = vadd.f32 %v81, %v82
    %v84 = vrot.slane %v83, 2
    %v85 = vadd.f32 %v83, %v84
    %v86 = vrot.slane %v85, 1
    %v87 = vadd.f32 %v85, %v86
    %s88 = vtos %v87
    %v89 = vstv %s88
    %v90 = vsel %vm22, %v76, 0.0
    %91 = vadd.xlane.f32.xlu0 %v90
    %v92 = vpop.xlane.xlu0 %91
    %v93 = vrot.slane %v92, 4
    %v94 = vadd.f32 %v92, %v93
    %v95 = vrot.slane %v94, 2
    %v96 = vadd.f32 %v94, %v95
    %v97 = vrot.slane %v96, 1
    %v98 = vadd.f32 %v96, %v97
    %s99 = vtos %v98
    %v100 = vstv %s99
    %v102 = vshra.s32 %v89, 23
    %v103 = vand.u32 %v102, 255
    %v104 = vand.u32 %v89, 8388607
    %vm105 = vcmp.gt.f32.partialorder %v89, 1.0
    %vm106 = vcmp.eq.s32.totalorder %v104, 0
    %v107 = vsub.s32 %v103, 127
    %v108 = vsub.s32 %v103, 126
    %v109 = vsel %vm106, %v107, %v108
    %v110 = vsel %vm105, %v109, 0
    %v111 = vshra.s32 %v110, 1
    %v112 = vsub.s32 %v110, %v111
    %v113 = vsub.s32 127, %v111
    %v114 = vshll.u32 %v113, 23
    %v116 = vsub.s32 127, %v112
    %v117 = vshll.u32 %v116, 23
    %v119 = vmul.f32 %v100, %v114
    %v120 = vmul.f32 %v119, %v117
    %v121 = vadd.f32 %v120, 0.0
    %s122 = vtos %v121
    %s123 = scalar_lea.smem [#allocation2], 0
    %124 = sst [smem:[%s123]] %s122
    // Predicated region
    $region10: #{fixed_hidden_mlp.1} parent=1 // pred_check
      _
    $region11: #{fixed_hidden_mlp.1} parent=1 // pred_check_branch
      %126 = sbr.rel (0) target = $region13
    $region12: #{fixed_hidden_mlp.1} parent=1 // pred_region
      %128 = vsyncadd [#allocation3], 0
      %s130 = sshll.u32 %s2, 4
      %s131 = int_to_ptr.hbm [resolvable:$true] %s130
      %133 = dma.smem_to_hbm [#allocation2], 16, %s131, [#allocation3]
    $region13: #{fixed_hidden_mlp.1} parent=1 // pred_fallthru
      _
    // Predicated region
    $region14: #{fixed_hidden_mlp.1} parent=1 // pred_check
      _
    $region15: #{fixed_hidden_mlp.1} parent=1 // pred_check_branch
      %135 = sbr.rel (0) target = $region17
    $region16: #{fixed_hidden_mlp.1} parent=1 // pred_region
      %137 = dma.done [#allocation3], 16
    $region17: #{fixed_hidden_mlp.1} parent=1 // pred_fallthru
      _
    %138 = sfence
    %139 = vsyncpa [#allocation3], 1

</llo_original>
